<compile_context>
chip_gen: v7x
topology: tpu7x:2x2x1
jax: 0.10.0
libtpu: 0.0.40
codegen_flags: <defaults>
</compile_context>

<pallas_src>
import jax
import jax.numpy as jnp
from jax import lax
from jax.experimental import pallas as pl
from jax.experimental.pallas import tpu as pltpu


def _round_up(n, m):
    return ((n + m - 1) // m) * m


def _pick_block_b(B):
    """Largest multiple-of-8 batch block <= 512 that divides round_up(B, 8),
    capped so the grid has >= 2 steps when the batch allows (v7x megacore)."""
    b_pad8 = _round_up(B, 8)
    upper = min(512, b_pad8)
    if b_pad8 >= 16:
        upper = min(upper, max(8, (b_pad8 // 2) // 8 * 8))
    cand = (upper // 8) * 8
    while cand > 8 and b_pad8 % cand != 0:
        cand -= 8
    return max(cand, 8)


def attention_layer_kernel(x_ref, w_ref, b_ref, o_ref):
    x = x_ref[...]                                   # [bb, Fp]  f32
    w = w_ref[...]                                   # [Fp, Hp]  bf16 (pre-transposed)
    b = b_ref[...]                                   # [1,  Hp]  f32

    # Linear: bf16 MXU matmul with f32 accumulation.
    logits = lax.dot_general(
        x.astype(jnp.bfloat16), w,
        dimension_numbers=(((1,), (0,)), ((), ())),
        preferred_element_type=jnp.float32,
    )                                                # [bb, Hp]
    logits = logits + b                              # padded cols carry -1e30 bias

    # Softmax over the hidden dim (whole row resident in one block).
    m = jnp.max(logits, axis=-1, keepdims=True)
    e = jnp.exp(logits - m)
    s = jnp.sum(e, axis=-1, keepdims=True)
    attn = e * pl.reciprocal(s, approx=True)         # EUP vrcp, off the VALU path

    # attended_output = attention_weights * x   (H == F, both padded to Hp == Fp)
    o_ref[...] = (attn * x).astype(o_ref.dtype)


def _build_call(x_dtype, B_pad, F_pad, H_pad, block_b, vmem_limit,
                single_buffer_resident):
    resident_kwargs = (
        dict(pipeline_mode=pl.Buffered(1)) if single_buffer_resident else {}
    )
    return pl.pallas_call(
        attention_layer_kernel,
        out_shape=jax.ShapeDtypeStruct((B_pad, F_pad), x_dtype),
        grid_spec=pltpu.PrefetchScalarGridSpec(
            num_scalar_prefetch=0,
            grid=(B_pad // block_b,),
            in_specs=[
                pl.BlockSpec((block_b, F_pad), lambda i: (i, 0)),        # x
                pl.BlockSpec((F_pad, H_pad), lambda i: (0, 0),           # W (resident)
                             **resident_kwargs),
                pl.BlockSpec((1, H_pad), lambda i: (0, 0),               # bias (resident)
                             **resident_kwargs),
            ],
            out_specs=pl.BlockSpec((block_b, F_pad), lambda i: (i, 0)),
        ),
        compiler_params=pltpu.CompilerParams(
            dimension_semantics=("parallel",),
            vmem_limit_bytes=vmem_limit,
        ),
    )


def attention_layer(x, weight, bias, *, block_b=None):
    """x: [B, F], weight: [H, F] (PyTorch layout), bias: [H].  Returns [B, F]."""
    B, F = x.shape
    H = weight.shape[0]
    assert H == F, "hidden_size must equal feature_size for attn * x broadcast"

    # Lane-dense padding: last dims to multiples of 128, batch to sublane/block.
    F_pad = _round_up(F, 128)
    H_pad = _round_up(H, 128)          # == F_pad since H == F
    if block_b is None:
        block_b = _pick_block_b(B)
    B_pad = _round_up(B, block_b)

    x_p = jnp.pad(x, ((0, B_pad - B), (0, F_pad - F)))
    # Pre-transpose + bf16 once in XLA (W is grid-invariant): [F_pad, H_pad].
    w_p = jnp.pad(weight.T, ((0, F_pad - F), (0, H_pad - H))).astype(jnp.bfloat16)
    # Padded hidden columns get a very negative bias -> exp ~ 0 -> softmax unaffected.
    # (Safe in f32/bf16; guard before moving logits to fp16/fp8.)
    b_p = jnp.pad(bias, (0, H_pad - H), constant_values=-1e30).reshape(1, H_pad)

    # Explicit scoped-VMEM budget: double-buffered x/out tiles + single-buffered
    # bf16 W + bias + softmax temporaries, with headroom; clamped for v7x (64 MiB).
    itemsize = jnp.dtype(x.dtype).itemsize
    xo_bytes = 2 * 2 * block_b * F_pad * itemsize          # x + out, double-buffered
    w_bytes = F_pad * H_pad * 2                            # bf16, single buffer
    tmp_bytes = 4 * block_b * H_pad * 4                    # logits/e/attn f32 + slack
    vmem_limit = xo_bytes + w_bytes + tmp_bytes + (4 << 20)
    vmem_limit = min(max(vmem_limit, 32 << 20), 64 << 20)

    # TODO(synk): if H_pad*F_pad grows past the VMEM budget (esp. v7x 64 MiB),
    # switch to a K-tiled accumulator variant (grid axis over F_pad//tk marked
    # "arbitrary", logits accumulated in VMEM scratch, softmax at the last k).
    try:
        out_p = _build_call(x.dtype, B_pad, F_pad, H_pad, block_b, vmem_limit,
                            single_buffer_resident=True)(x_p, w_p, b_p)
    except Exception:
        # Fallback in case pl.Buffered(1) is rejected by this Pallas version.
        out_p = _build_call(x.dtype, B_pad, F_pad, H_pad, block_b, vmem_limit,
                            single_buffer_resident=False)(x_p, w_p, b_p)

    return out_p[:B, :F]


if __name__ == "__main__":
    batch = 8
    feature_size = 32
    hidden_size = 32  # must equal feature_size (PyTorch forward broadcasts attn * x)

    key = jax.random.PRNGKey(0)
    kx, kw, kb = jax.random.split(key, 3)

    x = jax.random.normal(kx, (batch, feature_size), dtype=jnp.float32)
    # Deterministic init mimicking nn.Linear's U(-1/sqrt(F), 1/sqrt(F))
    bound = 1.0 / (feature_size ** 0.5)
    weight = jax.random.uniform(kw, (hidden_size, feature_size),
                                dtype=jnp.float32, minval=-bound, maxval=bound)
    bias = jax.random.uniform(kb, (hidden_size,),
                              dtype=jnp.float32, minval=-bound, maxval=bound)

    out = attention_layer(x, weight, bias)
    jax.block_until_ready(out)

    # Reference check in plain JAX (tolerance loosened for bf16 matmul +
    # approx reciprocal).
    logits = x @ weight.T + bias
    ref = jax.nn.softmax(logits, axis=1) * x
    assert jnp.allclose(out, ref, atol=2e-2, rtol=2e-2), "mismatch vs reference"

    print("KERNEL_OK")
</pallas_src>

<mosaic_0001>
module attributes {stable_mosaic.version = 11 : i64} {
  func.func @attention_layer_kernel(%arg0: i32, %arg1: memref<8x128xf32, #tpu.memory_space<vmem>>, %arg2: memref<128x128xbf16, #tpu.memory_space<vmem>>, %arg3: memref<1x128xf32, #tpu.memory_space<vmem>>, %arg4: memref<8x128xf32, #tpu.memory_space<vmem>>) attributes {dimension_semantics = [#tpu.dimension_semantics<parallel>], iteration_bounds = array<i64: 1>, scalar_prefetch = 0 : i64, scratch_operands = 0 : i64, tpu.core_type = #tpu.core_type<tc>, window_params = [{transform_indices = @transform_0, window_bounds = array<i64: 8, 128>}, {pipeline_mode = #tpu.pipeline_mode<synchronous>, transform_indices = @transform_1, window_bounds = array<i64: 128, 128>}, {pipeline_mode = #tpu.pipeline_mode<synchronous>, transform_indices = @transform_2, window_bounds = array<i64: 1, 128>}, {transform_indices = @transform_3, window_bounds = array<i64: 8, 128>}]} {
    %c0 = arith.constant 0 : index
    %c0_0 = arith.constant 0 : index
    %0 = vector.load %arg1[%c0, %c0_0] : memref<8x128xf32, #tpu.memory_space<vmem>>, vector<8x128xf32>
    %c0_1 = arith.constant 0 : index
    %c0_2 = arith.constant 0 : index
    %1 = vector.load %arg2[%c0_1, %c0_2] : memref<128x128xbf16, #tpu.memory_space<vmem>>, vector<128x128xbf16>
    %c0_3 = arith.constant 0 : index
    %c0_4 = arith.constant 0 : index
    %2 = vector.load %arg3[%c0_3, %c0_4] : memref<1x128xf32, #tpu.memory_space<vmem>>, vector<1x128xf32>
    %3 = arith.truncf %0 : vector<8x128xf32> to vector<8x128xbf16>
    %cst = arith.constant dense<0.000000e+00> : vector<8x128xf32>
    %4 = tpu.matmul %3, %1, %cst {dimension_numbers = #tpu.dot_dimension_numbers<[1], [0], [0], [1], [0, 0, 1, 1], [], []>} : vector<8x128xbf16>, vector<128x128xbf16>, vector<8x128xf32> -> vector<8x128xf32>
    %5 = vector.broadcast %2 : vector<1x128xf32> to vector<8x128xf32>
    %6 = arith.addf %4, %5 : vector<8x128xf32>
    %cst_5 = arith.constant dense<0xFF800000> : vector<8xf32>
    %7 = vector.multi_reduction <maximumf>, %6, %cst_5 [1] : vector<8x128xf32> to vector<8xf32>
    %8 = vector.shape_cast %7 : vector<8xf32> to vector<8x1xf32>
    %9 = vector.broadcast %8 : vector<8x1xf32> to vector<8x128xf32>
    %10 = arith.subf %6, %9 : vector<8x128xf32>
    %11 = math.exp %10 : vector<8x128xf32>
    %cst_6 = arith.constant dense<0.000000e+00> : vector<8xf32>
    %12 = vector.multi_reduction <add>, %11, %cst_6 [1] : vector<8x128xf32> to vector<8xf32>
    %13 = vector.shape_cast %12 : vector<8xf32> to vector<8x1xf32>
    %14 = tpu.reciprocal %13 {approx = true} : vector<8x1xf32> -> vector<8x1xf32>
    %15 = vector.broadcast %14 : vector<8x1xf32> to vector<8x128xf32>
    %16 = arith.mulf %11, %15 : vector<8x128xf32>
    %17 = arith.mulf %16, %0 : vector<8x128xf32>
    %c0_7 = arith.constant 0 : index
    %c0_8 = arith.constant 0 : index
    %18 = vector.load %arg4[%c0_7, %c0_8] : memref<8x128xf32, #tpu.memory_space<vmem>>, vector<8x128xf32>
    tpu.vector_store %arg4[%c0_7, %c0_8], %17 {strides = array<i32>} : memref<8x128xf32, #tpu.memory_space<vmem>>, vector<8x128xf32>,
    return
  }
  func.func @transform_0(%arg0: i32) -> (i32, i32) {
    %c0_i32 = arith.constant 0 : i32
    %c0_i32_0 = arith.constant 0 : i32
    return %arg0, %c0_i32 : i32, i32
  }
  func.func @transform_1(%arg0: i32) -> (i32, i32) {
    %c0_i32 = arith.constant 0 : i32
    %c0_i32_0 = arith.constant 0 : i32
    %c0_i32_1 = arith.constant 0 : i32
    return %c0_i32, %c0_i32_0 : i32, i32
  }
  func.func @transform_2(%arg0: i32) -> (i32, i32) {
    %c0_i32 = arith.constant 0 : i32
    %c0_i32_0 = arith.constant 0 : i32
    %c0_i32_1 = arith.constant 0 : i32
    return %c0_i32, %c0_i32_0 : i32, i32
  }
  func.func @transform_3(%arg0: i32) -> (i32, i32) {
    %c0_i32 = arith.constant 0 : i32
    %c0_i32_0 = arith.constant 0 : i32
    return %arg0, %c0_i32 : i32, i32
  }
}

module attributes {stable_mosaic.version = 11 : i64} {
  func.func @attention_layer_kernel(%arg0: i32, %arg1: memref<8x128xf32, #tpu.memory_space<vmem>>, %arg2: memref<128x128xbf16, #tpu.memory_space<vmem>>, %arg3: memref<1x128xf32, #tpu.memory_space<vmem>>, %arg4: memref<8x128xf32, #tpu.memory_space<vmem>>) attributes {dimension_semantics = [#tpu.dimension_semantics<parallel>], iteration_bounds = array<i64: 1>, scalar_prefetch = 0 : i64, scratch_operands = 0 : i64, tpu.core_type = #tpu.core_type<tc>, window_params = [{transform_indices = @transform_0, window_bounds = array<i64: 8, 128>}, {pipeline_mode = #tpu.pipeline_mode<synchronous>, transform_indices = @transform_1, window_bounds = array<i64: 128, 128>}, {pipeline_mode = #tpu.pipeline_mode<synchronous>, transform_indices = @transform_2, window_bounds = array<i64: 1, 128>}, {transform_indices = @transform_3, window_bounds = array<i64: 8, 128>}]} {
    %c0 = arith.constant 0 : index
    %c0_0 = arith.constant 0 : index
    %0 = vector.load %arg1[%c0, %c0_0] : memref<8x128xf32, #tpu.memory_space<vmem>>, vector<8x128xf32>
    %c0_1 = arith.constant 0 : index
    %c0_2 = arith.constant 0 : index
    %1 = vector.load %arg2[%c0_1, %c0_2] : memref<128x128xbf16, #tpu.memory_space<vmem>>, vector<128x128xbf16>
    %c0_3 = arith.constant 0 : index
    %c0_4 = arith.constant 0 : index
    %2 = vector.load %arg3[%c0_3, %c0_4] : memref<1x128xf32, #tpu.memory_space<vmem>>, vector<1x128xf32>
    %3 = arith.truncf %0 : vector<8x128xf32> to vector<8x128xbf16>
    %cst = arith.constant dense<0.000000e+00> : vector<8x128xf32>
    %4 = tpu.matmul %3, %1, %cst {dimension_numbers = #tpu.dot_dimension_numbers<[1], [0], [0], [1], [0, 0, 1, 1], [], []>} : vector<8x128xbf16>, vector<128x128xbf16>, vector<8x128xf32> -> vector<8x128xf32>
    %5 = vector.broadcast %2 : vector<1x128xf32> to vector<8x128xf32>
    %6 = arith.addf %4, %5 : vector<8x128xf32>
    %cst_5 = arith.constant dense<0xFF800000> : vector<8xf32>
    %7 = vector.multi_reduction <maximumf>, %6, %cst_5 [1] : vector<8x128xf32> to vector<8xf32>
    %8 = vector.shape_cast %7 : vector<8xf32> to vector<8x1xf32>
    %9 = vector.broadcast %8 : vector<8x1xf32> to vector<8x128xf32>
    %10 = arith.subf %6, %9 : vector<8x128xf32>
    %11 = math.exp %10 : vector<8x128xf32>
    %cst_6 = arith.constant dense<0.000000e+00> : vector<8xf32>
    %12 = vector.multi_reduction <add>, %11, %cst_6 [1] : vector<8x128xf32> to vector<8xf32>
    %13 = vector.shape_cast %12 : vector<8xf32> to vector<8x1xf32>
    %14 = tpu.reciprocal %13 {approx = true} : vector<8x1xf32> -> vector<8x1xf32>
    %15 = vector.broadcast %14 : vector<8x1xf32> to vector<8x128xf32>
    %16 = arith.mulf %11, %15 : vector<8x128xf32>
    %17 = arith.mulf %16, %0 : vector<8x128xf32>
    %c0_7 = arith.constant 0 : index
    %c0_8 = arith.constant 0 : index
    %18 = vector.load %arg4[%c0_7, %c0_8] : memref<8x128xf32, #tpu.memory_space<vmem>>, vector<8x128xf32>
    tpu.vector_store %arg4[%c0_7, %c0_8], %17 {strides = array<i32>} : memref<8x128xf32, #tpu.memory_space<vmem>>, vector<8x128xf32>,
    return
  }
  func.func @transform_0(%arg0: i32) -> (i32, i32) {
    %c0_i32 = arith.constant 0 : i32
    %c0_i32_0 = arith.constant 0 : i32
    return %arg0, %c0_i32 : i32, i32
  }
  func.func @transform_1(%arg0: i32) -> (i32, i32) {
    %c0_i32 = arith.constant 0 : i32
    %c0_i32_0 = arith.constant 0 : i32
    %c0_i32_1 = arith.constant 0 : i32
    return %c0_i32, %c0_i32_0 : i32, i32
  }
  func.func @transform_2(%arg0: i32) -> (i32, i32) {
    %c0_i32 = arith.constant 0 : i32
    %c0_i32_0 = arith.constant 0 : i32
    %c0_i32_1 = arith.constant 0 : i32
    return %c0_i32, %c0_i32_0 : i32, i32
  }
  func.func @transform_3(%arg0: i32) -> (i32, i32) {
    %c0_i32 = arith.constant 0 : i32
    %c0_i32_0 = arith.constant 0 : i32
    return %arg0, %c0_i32 : i32, i32
  }
}

</mosaic_0001>

<llo_original>
// kernel: tpu_custom_call.1
$region0: #{tpu_custom_call.1}
  #allocation0 [shape = 'u32[]', space=smem, size = 0x4, offset = 0x4, fixed_abs, tag = 'smem constant byte address 0x4 - core index']
  #allocation1 [shape = 'u32[144,128]{1,0:T(1,128)}', space=vmem, size = 0x12000, scoped, tag = 'internal scratch']
  %s0 = inlined_call_operand.hbm [shape: f32[8,128], index: 0, kind: input, shape index: {}]
  %s1 = inlined_call_operand.hbm [shape: bf16[128,128], index: 1, kind: input, shape index: {}]
  %s2 = inlined_call_operand.vmem [shape: f32[1,128], index: 2, kind: input, shape index: {}]
  %s3 = inlined_call_operand.hbm [shape: f32[8,128], index: 3, kind: output, shape index: {}]
  %s4 = sld [smem:[#allocation0]]
  $region30: #{tpu_custom_call.1} parent=0
    _
  %s6 = ssub.s32 1, %s4
  %s7 = scalar_select 0, %s6, %s4
  $region1: #{tpu_custom_call.1} parent=0
    #allocation2 [shape = 'u8[4096]{0}', space=vmem, size = 0x1000, scoped, tag = 'input window, operand 0, single buffered']
    #allocation3 [shape = 's32[1]{0}', space=sflag, size = 0x4, scoped, tag = 'scoped memory for tpu_custom_call.1']
    #allocation4 [shape = 's32[1]{0}', space=sflag, size = 0x4, scoped, tag = 'scoped memory for tpu_custom_call.1']
    #allocation5 [shape = 'u8[32768]{0}', space=vmem, size = 0x8000, scoped, tag = 'input window, operand 1, single buffered']
    #allocation6 [shape = 's32[1]{0}', space=sflag, size = 0x4, scoped, tag = 'scoped memory for tpu_custom_call.1']
    #allocation7 [shape = 'u8[4096]{0}', space=vmem, size = 0x1000, scoped, tag = 'output window, operand 0, single buffered']
    %8 = vsyncpa [#allocation3], 0
    %9 = vsyncpa [#allocation6], 0
    %10 = vsyncpa [#allocation4], 0
    // Predicated region
    $region2: #{tpu_custom_call.1} parent=1 // pred_check
      _
    $region3: #{tpu_custom_call.1} parent=1 // pred_check_branch
      %12 = sbr.rel (0) target = $region5
    $region4: #{tpu_custom_call.1} parent=1 // pred_region
      %s14 = ssub.s32 128, 128
      %15 = vsyncadd [#allocation3], %s14
      %s17 = sshll.u32 [#allocation2], 4
      %s18 = int_to_ptr.vmem [resolvable:$true] %s17
      %20 = dma.hbm_to_vmem [thread:$0]  %s0, 128, %s18, [#allocation3]
    $region5: #{tpu_custom_call.1} parent=1 // pred_fallthru
      _
    // Predicated region
    $region6: #{tpu_custom_call.1} parent=1 // pred_check
      _
    $region7: #{tpu_custom_call.1} parent=1 // pred_check_branch
      %22 = sbr.rel (0) target = $region9
    $region8: #{tpu_custom_call.1} parent=1 // pred_region
      %s24 = ssub.s32 1024, 1024
      %25 = vsyncadd [#allocation6], %s24
      %s26 = sshll.u32 [#allocation5], 4
      %s27 = int_to_ptr.vmem [resolvable:$true] %s26
      %32 = dma.hbm_to_vmem [thread:$0]  %s1, 1024, %s27, [#allocation6], 64, 64, 4
    $region9: #{tpu_custom_call.1} parent=1 // pred_fallthru
      _
    // Predicated region
    $region10: #{tpu_custom_call.1} parent=1 // pred_check
      _
    $region11: #{tpu_custom_call.1} parent=1 // pred_check_branch
      %34 = sbr.rel (0) target = $region13
    $region12: #{tpu_custom_call.1} parent=1 // pred_region
      _
    $region13: #{tpu_custom_call.1} parent=1 // pred_fallthru
      _
    // Predicated region
    $region14: #{tpu_custom_call.1} parent=1 // pred_check
      _
    $region15: #{tpu_custom_call.1} parent=1 // pred_check_branch
      %36 = sbr.rel (0) target = $region17
    $region16: #{tpu_custom_call.1} parent=1 // pred_region
      %37 = dma.done [#allocation3], 128
    $region17: #{tpu_custom_call.1} parent=1 // pred_fallthru
      _
    // Predicated region
    $region18: #{tpu_custom_call.1} parent=1 // pred_check
      _
    $region19: #{tpu_custom_call.1} parent=1 // pred_check_branch
      %39 = sbr.rel (0) target = $region21
    $region20: #{tpu_custom_call.1} parent=1 // pred_region
      %40 = dma.done [#allocation6], 1024
    $region21: #{tpu_custom_call.1} parent=1 // pred_fallthru
      _
    %v42 = vld [vmem:[#allocation2] sm:$0xff]
    %v43 = vld [vmem:[#allocation5] sm:$0xf]
    %v44 = vld [vmem:[#allocation5 + $0x4] sm:$0xf]
    %v45 = vld [vmem:[#allocation5 + $0x8] sm:$0xf]
    %v46 = vld [vmem:[#allocation5 + $0xc] sm:$0xf]
    %v47 = vld [vmem:[#allocation5 + $0x10] sm:$0xf]
    %v48 = vld [vmem:[#allocation5 + $0x14] sm:$0xf]
    %v49 = vld [vmem:[#allocation5 + $0x18] sm:$0xf]
    %v50 = vld [vmem:[#allocation5 + $0x1c] sm:$0xf]
    %v51 = vld [vmem:[#allocation5 + $0x20] sm:$0xf]
    %v52 = vld [vmem:[#allocation5 + $0x24] sm:$0xf]
    %v53 = vld [vmem:[#allocation5 + $0x28] sm:$0xf]
    %v54 = vld [vmem:[#allocation5 + $0x2c] sm:$0xf]
    %v55 = vld [vmem:[#allocation5 + $0x30] sm:$0xf]
    %v56 = vld [vmem:[#allocation5 + $0x34] sm:$0xf]
    %v57 = vld [vmem:[#allocation5 + $0x38] sm:$0xf]
    %v58 = vld [vmem:[#allocation5 + $0x3c] sm:$0xf]
    %v59 = vld [vmem:[%s2] sm:$0x1]
    %v60 = vpack.c.bf16 %v42, %v42
    %v62 = vlaneseq
    %v63 = vshrl.u32 %v62, 7
    %v64 = vsub.s32 0, %v63
    %v65 = vrot.slane %v59, %v64
    %v83 = vunpack.c.l.b16 %v43
    %v84 = vunpack.c.l.b16 %v44
    %v85 = vunpack.c.l.b16 %v45
    %v86 = vunpack.c.l.b16 %v46
    %v87 = vunpack.c.l.b16 %v47
    %v88 = vunpack.c.l.b16 %v48
    %v89 = vunpack.c.l.b16 %v49
    %v90 = vunpack.c.l.b16 %v50
    %v91 = vunpack.c.l.b16 %v51
    %v92 = vunpack.c.l.b16 %v52
    %v93 = vunpack.c.l.b16 %v53
    %v94 = vunpack.c.l.b16 %v54
    %v95 = vunpack.c.l.b16 %v55
    %v96 = vunpack.c.l.b16 %v56
    %v97 = vunpack.c.l.b16 %v57
    %v98 = vunpack.c.l.b16 %v58
    %v99 = vpack.c.b16 %v84, %v83
    %v100 = vpack.c.b16 %v86, %v85
    %v101 = vpack.c.b16 %v88, %v87
    %v102 = vpack.c.b16 %v90, %v89
    %v103 = vpack.c.b16 %v92, %v91
    %v104 = vpack.c.b16 %v94, %v93
    %v105 = vpack.c.b16 %v96, %v95
    %v106 = vpack.c.b16 %v98, %v97
    %115 = vmatprep.subr.bf16.mxu0 0
    %116 = vmatpush1.bf16.msra.mxu0 %v99
    %117 = vmatprep.subr.bf16.mxu0 0
    %118 = vmatpush1.bf16.msra.mxu0 %v100
    %119 = vmatprep.subr.bf16.mxu0 0
    %120 = vmatpush1.bf16.msra.mxu0 %v101
    %121 = vmatprep.subr.bf16.mxu0 0
    %122 = vmatpush1.bf16.msra.mxu0 %v102
    %123 = vmatprep.subr.bf16.mxu0 0
    %124 = vmatpush1.bf16.msra.mxu0 %v103
    %125 = vmatprep.subr.bf16.mxu0 0
    %126 = vmatpush1.bf16.msra.mxu0 %v104
    %127 = vmatprep.subr.bf16.mxu0 0
    %128 = vmatpush1.bf16.msra.mxu0 %v105
    %129 = vmatprep.subr.bf16.mxu0 0
    %130 = vmatpush1.bf16.msra.mxu0 %v106
    %131 = vmatprep.subr.bf16.mxu0 0
    %132 = vmatpush1.bf16.msra.mxu0 0
    %133 = vmatprep.subr.bf16.mxu0 0
    %134 = vmatpush1.bf16.msra.mxu0 0
    %135 = vmatprep.subr.bf16.mxu0 0
    %136 = vmatpush1.bf16.msra.mxu0 0
    %137 = vmatprep.subr.bf16.mxu0 0
    %138 = vmatpush1.bf16.msra.mxu0 0
    %139 = vmatprep.subr.bf16.mxu0 0
    %140 = vmatpush1.bf16.msra.mxu0 0
    %141 = vmatprep.subr.bf16.mxu0 0
    %142 = vmatpush1.bf16.msra.mxu0 0
    %143 = vmatprep.subr.bf16.mxu0 0
    %144 = vmatpush1.bf16.msra.mxu0 0
    %145 = vmatprep.subr.bf16.mxu0 0
    %146 = vmatpush1.bf16.msra.mxu0 0
    %147 = vmatprep.mubr.bf16.mxu0 0
    %148 = vmatmul.mubr.bf16.gmra.mrb[0].mxu0 %v60
    %v149 = vpop.f32.mrb[0].mxu0
    %v150 = vadd.f32 %v65, %v149
    %v151 = vpop.f32.mrb[0].mxu0
    %v152 = vpop.f32.mrb[0].mxu0
    %v153 = vpop.f32.mrb[0].mxu0
    %154 = vdwg.mxu0
    %155 = vmax.xlane.f32.xlu0 %v150
    %v156 = vpop.xlane.xlu0 %155
    %v157 = vsub.f32 %v150, %v156
    %v158 = vmul.f32 %v157, 1.442695
    %v159 = vpow.pop %v158
    %160 = vadd.xlane.f32.xlu0 %v159
    %v161 = vpop.xlane.xlu0 %160
    %v162 = vrcp.pop %v161
    %v163 = vmul.f32 %v159, %v162
    %v164 = vmul.f32 %v163, %v42
    %165 = vst [vmem:[#allocation7] sm:$0xff] %v164
    // Predicated region
    $region22: #{tpu_custom_call.1} parent=1 // pred_check
      _
    $region23: #{tpu_custom_call.1} parent=1 // pred_check_branch
      %167 = sbr.rel (0) target = $region25
    $region24: #{tpu_custom_call.1} parent=1 // pred_region
      %s169 = ssub.s32 128, 128
      %170 = vsyncadd [#allocation4], %s169
      %s172 = sshll.u32 [#allocation7], 4
      %s173 = int_to_ptr.vmem [resolvable:$true] %s172
      %175 = dma.vmem_to_hbm [thread:$0]  %s173, 128, %s3, [#allocation4]
    $region25: #{tpu_custom_call.1} parent=1 // pred_fallthru
      _
    // Predicated region
    $region26: #{tpu_custom_call.1} parent=1 // pred_check
      _
    $region27: #{tpu_custom_call.1} parent=1 // pred_check_branch
      %177 = sbr.rel (0) target = $region29
    $region28: #{tpu_custom_call.1} parent=1 // pred_region
      %178 = dma.done [#allocation4], 128
    $region29: #{tpu_custom_call.1} parent=1 // pred_fallthru
      _
    %179 = vsyncpa [#allocation3], 1
    %180 = vsyncpa [#allocation6], 1
    %181 = vsyncpa [#allocation4], 1

// kernel: tpu_custom_call.1
$region0: #{tpu_custom_call.1}
  #allocation0 [shape = 'u32[]', space=smem, size = 0x4, offset = 0x4, fixed_abs, tag = 'smem constant byte address 0x4 - core index']
  #allocation1 [shape = 'u32[144,128]{1,0:T(1,128)}', space=vmem, size = 0x12000, scoped, tag = 'internal scratch']
  %s0 = inlined_call_operand.hbm [shape: f32[8,128], index: 0, kind: input, shape index: {}]
  %s1 = inlined_call_operand.hbm [shape: bf16[128,128], index: 1, kind: input, shape index: {}]
  %s2 = inlined_call_operand.vmem [shape: f32[1,128], index: 2, kind: input, shape index: {}]
  %s3 = inlined_call_operand.hbm [shape: f32[8,128], index: 3, kind: output, shape index: {}]
  %s4 = sld [smem:[#allocation0]]
  $region30: #{tpu_custom_call.1} parent=0
    _
  %s6 = ssub.s32 1, %s4
  %s7 = scalar_select 0, %s6, %s4
  $region1: #{tpu_custom_call.1} parent=0
    #allocation2 [shape = 'u8[4096]{0}', space=vmem, size = 0x1000, scoped, tag = 'input window, operand 0, single buffered']
    #allocation3 [shape = 's32[1]{0}', space=sflag, size = 0x4, scoped, tag = 'scoped memory for tpu_custom_call.1']
    #allocation4 [shape = 's32[1]{0}', space=sflag, size = 0x4, scoped, tag = 'scoped memory for tpu_custom_call.1']
    #allocation5 [shape = 'u8[32768]{0}', space=vmem, size = 0x8000, scoped, tag = 'input window, operand 1, single buffered']
    #allocation6 [shape = 's32[1]{0}', space=sflag, size = 0x4, scoped, tag = 'scoped memory for tpu_custom_call.1']
    #allocation7 [shape = 'u8[4096]{0}', space=vmem, size = 0x1000, scoped, tag = 'output window, operand 0, single buffered']
    %8 = vsyncpa [#allocation3], 0
    %9 = vsyncpa [#allocation6], 0
    %10 = vsyncpa [#allocation4], 0
    // Predicated region
    $region2: #{tpu_custom_call.1} parent=1 // pred_check
      _
    $region3: #{tpu_custom_call.1} parent=1 // pred_check_branch
      %12 = sbr.rel (0) target = $region5
    $region4: #{tpu_custom_call.1} parent=1 // pred_region
      %s14 = ssub.s32 128, 128
      %15 = vsyncadd [#allocation3], %s14
      %s17 = sshll.u32 [#allocation2], 4
      %s18 = int_to_ptr.vmem [resolvable:$true] %s17
      %20 = dma.hbm_to_vmem [thread:$0]  %s0, 128, %s18, [#allocation3]
    $region5: #{tpu_custom_call.1} parent=1 // pred_fallthru
      _
    // Predicated region
    $region6: #{tpu_custom_call.1} parent=1 // pred_check
      _
    $region7: #{tpu_custom_call.1} parent=1 // pred_check_branch
      %22 = sbr.rel (0) target = $region9
    $region8: #{tpu_custom_call.1} parent=1 // pred_region
      %s24 = ssub.s32 1024, 1024
      %25 = vsyncadd [#allocation6], %s24
      %s26 = sshll.u32 [#allocation5], 4
      %s27 = int_to_ptr.vmem [resolvable:$true] %s26
      %32 = dma.hbm_to_vmem [thread:$0]  %s1, 1024, %s27, [#allocation6], 64, 64, 4
    $region9: #{tpu_custom_call.1} parent=1 // pred_fallthru
      _
    // Predicated region
    $region10: #{tpu_custom_call.1} parent=1 // pred_check
      _
    $region11: #{tpu_custom_call.1} parent=1 // pred_check_branch
      %34 = sbr.rel (0) target = $region13
    $region12: #{tpu_custom_call.1} parent=1 // pred_region
      _
    $region13: #{tpu_custom_call.1} parent=1 // pred_fallthru
      _
    // Predicated region
    $region14: #{tpu_custom_call.1} parent=1 // pred_check
      _
    $region15: #{tpu_custom_call.1} parent=1 // pred_check_branch
      %36 = sbr.rel (0) target = $region17
    $region16: #{tpu_custom_call.1} parent=1 // pred_region
      %37 = dma.done [#allocation3], 128
    $region17: #{tpu_custom_call.1} parent=1 // pred_fallthru
      _
    // Predicated region
    $region18: #{tpu_custom_call.1} parent=1 // pred_check
      _
    $region19: #{tpu_custom_call.1} parent=1 // pred_check_branch
      %39 = sbr.rel (0) target = $region21
    $region20: #{tpu_custom_call.1} parent=1 // pred_region
      %40 = dma.done [#allocation6], 1024
    $region21: #{tpu_custom_call.1} parent=1 // pred_fallthru
      _
    %v42 = vld [vmem:[#allocation2] sm:$0xff]
    %v43 = vld [vmem:[#allocation5] sm:$0xf]
    %v44 = vld [vmem:[#allocation5 + $0x4] sm:$0xf]
    %v45 = vld [vmem:[#allocation5 + $0x8] sm:$0xf]
    %v46 = vld [vmem:[#allocation5 + $0xc] sm:$0xf]
    %v47 = vld [vmem:[#allocation5 + $0x10] sm:$0xf]
    %v48 = vld [vmem:[#allocation5 + $0x14] sm:$0xf]
    %v49 = vld [vmem:[#allocation5 + $0x18] sm:$0xf]
    %v50 = vld [vmem:[#allocation5 + $0x1c] sm:$0xf]
    %v51 = vld [vmem:[#allocation5 + $0x20] sm:$0xf]
    %v52 = vld [vmem:[#allocation5 + $0x24] sm:$0xf]
    %v53 = vld [vmem:[#allocation5 + $0x28] sm:$0xf]
    %v54 = vld [vmem:[#allocation5 + $0x2c] sm:$0xf]
    %v55 = vld [vmem:[#allocation5 + $0x30] sm:$0xf]
    %v56 = vld [vmem:[#allocation5 + $0x34] sm:$0xf]
    %v57 = vld [vmem:[#allocation5 + $0x38] sm:$0xf]
    %v58 = vld [vmem:[#allocation5 + $0x3c] sm:$0xf]
    %v59 = vld [vmem:[%s2] sm:$0x1]
    %v60 = vpack.c.bf16 %v42, %v42
    %v62 = vlaneseq
    %v63 = vshrl.u32 %v62, 7
    %v64 = vsub.s32 0, %v63
    %v65 = vrot.slane %v59, %v64
    %v83 = vunpack.c.l.b16 %v43
    %v84 = vunpack.c.l.b16 %v44
    %v85 = vunpack.c.l.b16 %v45
    %v86 = vunpack.c.l.b16 %v46
    %v87 = vunpack.c.l.b16 %v47
    %v88 = vunpack.c.l.b16 %v48
    %v89 = vunpack.c.l.b16 %v49
    %v90 = vunpack.c.l.b16 %v50
    %v91 = vunpack.c.l.b16 %v51
    %v92 = vunpack.c.l.b16 %v52
    %v93 = vunpack.c.l.b16 %v53
    %v94 = vunpack.c.l.b16 %v54
    %v95 = vunpack.c.l.b16 %v55
    %v96 = vunpack.c.l.b16 %v56
    %v97 = vunpack.c.l.b16 %v57
    %v98 = vunpack.c.l.b16 %v58
    %v99 = vpack.c.b16 %v84, %v83
    %v100 = vpack.c.b16 %v86, %v85
    %v101 = vpack.c.b16 %v88, %v87
    %v102 = vpack.c.b16 %v90, %v89
    %v103 = vpack.c.b16 %v92, %v91
    %v104 = vpack.c.b16 %v94, %v93
    %v105 = vpack.c.b16 %v96, %v95
    %v106 = vpack.c.b16 %v98, %v97
    %115 = vmatprep.subr.bf16.mxu0 0
    %116 = vmatpush1.bf16.msra.mxu0 %v99
    %117 = vmatprep.subr.bf16.mxu0 0
    %118 = vmatpush1.bf16.msra.mxu0 %v100
    %119 = vmatprep.subr.bf16.mxu0 0
    %120 = vmatpush1.bf16.msra.mxu0 %v101
    %121 = vmatprep.subr.bf16.mxu0 0
    %122 = vmatpush1.bf16.msra.mxu0 %v102
    %123 = vmatprep.subr.bf16.mxu0 0
    %124 = vmatpush1.bf16.msra.mxu0 %v103
    %125 = vmatprep.subr.bf16.mxu0 0
    %126 = vmatpush1.bf16.msra.mxu0 %v104
    %127 = vmatprep.subr.bf16.mxu0 0
    %128 = vmatpush1.bf16.msra.mxu0 %v105
    %129 = vmatprep.subr.bf16.mxu0 0
    %130 = vmatpush1.bf16.msra.mxu0 %v106
    %131 = vmatprep.subr.bf16.mxu0 0
    %132 = vmatpush1.bf16.msra.mxu0 0
    %133 = vmatprep.subr.bf16.mxu0 0
    %134 = vmatpush1.bf16.msra.mxu0 0
    %135 = vmatprep.subr.bf16.mxu0 0
    %136 = vmatpush1.bf16.msra.mxu0 0
    %137 = vmatprep.subr.bf16.mxu0 0
    %138 = vmatpush1.bf16.msra.mxu0 0
    %139 = vmatprep.subr.bf16.mxu0 0
    %140 = vmatpush1.bf16.msra.mxu0 0
    %141 = vmatprep.subr.bf16.mxu0 0
    %142 = vmatpush1.bf16.msra.mxu0 0
    %143 = vmatprep.subr.bf16.mxu0 0
    %144 = vmatpush1.bf16.msra.mxu0 0
    %145 = vmatprep.subr.bf16.mxu0 0
    %146 = vmatpush1.bf16.msra.mxu0 0
    %147 = vmatprep.mubr.bf16.mxu0 0
    %148 = vmatmul.mubr.bf16.gmra.mrb[0].mxu0 %v60
    %v149 = vpop.f32.mrb[0].mxu0
    %v150 = vadd.f32 %v65, %v149
    %v151 = vpop.f32.mrb[0].mxu0
    %v152 = vpop.f32.mrb[0].mxu0
    %v153 = vpop.f32.mrb[0].mxu0
    %154 = vdwg.mxu0
    %155 = vmax.xlane.f32.xlu0 %v150
    %v156 = vpop.xlane.xlu0 %155
    %v157 = vsub.f32 %v150, %v156
    %v158 = vmul.f32 %v157, 1.442695
    %v159 = vpow.pop %v158
    %160 = vadd.xlane.f32.xlu0 %v159
    %v161 = vpop.xlane.xlu0 %160
    %v162 = vrcp.pop %v161
    %v163 = vmul.f32 %v159, %v162
    %v164 = vmul.f32 %v163, %v42
    %165 = vst [vmem:[#allocation7] sm:$0xff] %v164
    // Predicated region
    $region22: #{tpu_custom_call.1} parent=1 // pred_check
      _
    $region23: #{tpu_custom_call.1} parent=1 // pred_check_branch
      %167 = sbr.rel (0) target = $region25
    $region24: #{tpu_custom_call.1} parent=1 // pred_region
      %s169 = ssub.s32 128, 128
      %170 = vsyncadd [#allocation4], %s169
      %s172 = sshll.u32 [#allocation7], 4
      %s173 = int_to_ptr.vmem [resolvable:$true] %s172
      %175 = dma.vmem_to_hbm [thread:$0]  %s173, 128, %s3, [#allocation4]
    $region25: #{tpu_custom_call.1} parent=1 // pred_fallthru
      _
    // Predicated region
    $region26: #{tpu_custom_call.1} parent=1 // pred_check
      _
    $region27: #{tpu_custom_call.1} parent=1 // pred_check_branch
      %177 = sbr.rel (0) target = $region29
    $region28: #{tpu_custom_call.1} parent=1 // pred_region
      %178 = dma.done [#allocation4], 128
    $region29: #{tpu_custom_call.1} parent=1 // pred_fallthru
      _
    %179 = vsyncpa [#allocation3], 1
    %180 = vsyncpa [#allocation6], 1
    %181 = vsyncpa [#allocation4], 1

</llo_original>
